<compile_context>
chip_gen: v7x
topology: tpu7x:2x2x1
jax: 0.10.0
libtpu: 0.0.40
codegen_flags: <defaults>
</compile_context>

<pallas_src>
import functools

import jax
import jax.numpy as jnp
from jax.experimental import pallas as pl
from jax.experimental.pallas import tpu as pltpu

SCALE = 64.0
MARGIN = 0.5
EPS = 1e-12  # torch.nn.functional.normalize default eps (clamps the norm)


def _round_up(x, m):
    return ((x + m - 1) // m) * m


def _arcface_kernel(logits_ref, labels_ref, loss_ref,
                    sq_ref, m_ref, l_ref, tgt_ref, *, num_classes):
    p = pl.program_id(1)          # 0: sum-of-squares pass, 1: online-logsumexp pass
    c = pl.program_id(2)          # class-tile index (reduction axis, innermost)
    nc = pl.num_programs(2)

    x = logits_ref[...].astype(jnp.float32)          # (Bt, Ct)
    bt, ct = x.shape

    # ---------------- pass 0: accumulate per-row sum of squares ----------------
    @pl.when(jnp.logical_and(p == 0, c == 0))
    def _():
        sq_ref[...] = jnp.zeros_like(sq_ref)

    @pl.when(p == 0)
    def _():
        sq_ref[...] += jnp.sum(x * x, axis=1, keepdims=True)

    # ---------------- pass 1: streaming (online) logsumexp ---------------------
    @pl.when(jnp.logical_and(p == 1, c == 0))
    def _():
        m_ref[...] = jnp.full_like(m_ref, -jnp.inf)
        l_ref[...] = jnp.zeros_like(l_ref)
        tgt_ref[...] = jnp.zeros_like(tgt_ref)

    @pl.when(p == 1)
    def _():
        # 1 / max(||x||, eps)  ==  rsqrt(max(sum x^2, eps^2))   (sqrt is monotone)
        inv_norm = jax.lax.rsqrt(jnp.maximum(sq_ref[...], EPS * EPS))   # (Bt, 1)

        labels = labels_ref[...]                                        # (Bt, 1) int32
        class_ids = jax.lax.broadcasted_iota(jnp.int32, (bt, ct), 1) + c * ct
        is_target = class_ids == labels                                 # one-hot via lane iota
        valid = class_ids < num_classes                                 # mask padded class lanes

        z = SCALE * (x * inv_norm - jnp.where(is_target, MARGIN, 0.0))
        z = jnp.where(valid, z, -jnp.inf)

        m_new = jnp.maximum(m_ref[...], jnp.max(z, axis=1, keepdims=True))
        alpha = jnp.exp(m_ref[...] - m_new)
        l_ref[...] = alpha * l_ref[...] + jnp.sum(jnp.exp(z - m_new), axis=1,
                                                  keepdims=True)
        m_ref[...] = m_new
        tgt_ref[...] += jnp.sum(jnp.where(is_target, z, 0.0), axis=1, keepdims=True)

    # ---------------- finalize: per-example cross entropy ----------------------
    @pl.when(jnp.logical_and(p == 1, c == nc - 1))
    def _():
        # CE_i = logsumexp(z_i) - z_i[label_i]
        loss_ref[...] = (m_ref[...] + jnp.log(l_ref[...]) - tgt_ref[...]
                         ).astype(loss_ref.dtype)


def arcface_loss(logits, labels, *, block_b=256, block_c=2048):
    """logits: (B, C) float32, labels: (B,) int -> scalar float32 loss.

    block_b / block_c are per-generation tile sizes (defaults sized for v7x's
    64 MiB VMEM with comfortable double-buffer headroom; sweep larger on v5e/v6e).
    NOTE: out-of-range labels yield an all-zero one-hot (loss = logsumexp),
    mirroring the scatter_-based PyTorch construction rather than erroring.
    """
    B, C = logits.shape

    # Lane-dense class tiles (mult of 128), sublane-aligned batch tiles (mult of 8).
    ct = min(block_c, _round_up(C, 128))
    bt = min(block_b, _round_up(B, 8))
    Cp = _round_up(C, ct)
    Bp = _round_up(B, bt)
    nb, nc = Bp // bt, Cp // ct

    x = logits.astype(jnp.float32)
    if (Bp, Cp) != (B, C):
        x = jnp.pad(x, ((0, Bp - B), (0, Cp - C)))
    lab = labels.astype(jnp.int32).reshape(B, 1)
    if Bp != B:
        lab = jnp.pad(lab, ((0, Bp - B), (0, 0)))

    kernel = functools.partial(_arcface_kernel, num_classes=C)

    per_example = pl.pallas_call(
        kernel,
        out_shape=jax.ShapeDtypeStruct((Bp, 1), jnp.float32),
        grid_spec=pltpu.PrefetchScalarGridSpec(
            num_scalar_prefetch=0,
            grid=(nb, 2, nc),                      # (batch, pass, class): reduction last
            in_specs=[
                pl.BlockSpec((bt, ct), lambda b, p, c: (b, c)),   # logits tile
                pl.BlockSpec((bt, 1), lambda b, p, c: (b, 0)),    # labels per batch tile
            ],
            out_specs=pl.BlockSpec((bt, 1), lambda b, p, c: (b, 0)),
            scratch_shapes=[
                pltpu.VMEM((bt, 1), jnp.float32),   # sum of squares
                pltpu.VMEM((bt, 1), jnp.float32),   # running max  m
                pltpu.VMEM((bt, 1), jnp.float32),   # running sum  l
                pltpu.VMEM((bt, 1), jnp.float32),   # target logit
            ],
        ),
        compiler_params=pltpu.CompilerParams(
            dimension_semantics=("parallel", "arbitrary", "arbitrary"),
            vmem_limit_bytes=32 * 1024 * 1024,
        ),
        cost_estimate=pl.CostEstimate(
            flops=10 * Bp * Cp,
            transcendentals=Bp * Cp + Bp,
            bytes_accessed=2 * Bp * Cp * 4 + Bp * 8,   # logits streamed twice (norm + lse pass)
        ),
    )(x, lab)

    # Final mean over real batch rows: trivial XLA reduce outside the kernel.
    return jnp.mean(per_example[:B, 0])


def arcface_loss_ref(logits, labels):
    """Pure-JAX reference mirroring the PyTorch module."""
    norm = jnp.sqrt(jnp.sum(logits * logits, axis=1, keepdims=True))
    cosine = logits / jnp.maximum(norm, EPS)
    one_hot = jax.nn.one_hot(labels, logits.shape[1], dtype=jnp.float32)
    z = SCALE * (cosine - MARGIN * one_hot)
    lse = jax.scipy.special.logsumexp(z, axis=1)
    target = jnp.take_along_axis(z, labels[:, None], axis=1)[:, 0]
    return jnp.mean(lse - target)


if __name__ == "__main__":
    key = jax.random.PRNGKey(0)
    k1, k2, k3, k4 = jax.random.split(key, 4)

    # Small shapes consistent with the module: batch=8, classes=16.
    B, C = 8, 16
    logits = jax.random.normal(k1, (B, C), dtype=jnp.float32)
    labels = jax.random.randint(k2, (B,), 0, C, dtype=jnp.int32)
    loss = arcface_loss(logits, labels)
    jax.block_until_ready(loss)
    ref = arcface_loss_ref(logits, labels)
    assert jnp.allclose(loss, ref, atol=1e-4, rtol=1e-4), (loss, ref)

    # Second case exercising multi-tile batch/class grid + lane/row padding paths.
    B2, C2 = 24, 300
    logits2 = jax.random.normal(k3, (B2, C2), dtype=jnp.float32)
    labels2 = jax.random.randint(k4, (B2,), 0, C2, dtype=jnp.int32)
    loss2 = arcface_loss(logits2, labels2, block_b=8, block_c=128)
    jax.block_until_ready(loss2)
    ref2 = arcface_loss_ref(logits2, labels2)
    assert jnp.allclose(loss2, ref2, atol=1e-4, rtol=1e-4), (loss2, ref2)

    print("KERNEL_OK")
</pallas_src>

<mosaic_0001>
module attributes {stable_mosaic.version = 11 : i64} {
  func.func @_arcface_kernel(%arg0: i32, %arg1: i32, %arg2: i32, %arg3: memref<8x128xf32, #tpu.memory_space<vmem>>, %arg4: memref<8x1xi32, #tpu.memory_space<vmem>>, %arg5: memref<8x1xf32, #tpu.memory_space<vmem>>, %arg6: memref<8x1xf32, #tpu.memory_space<vmem>>, %arg7: memref<8x1xf32, #tpu.memory_space<vmem>>, %arg8: memref<8x1xf32, #tpu.memory_space<vmem>>, %arg9: memref<8x1xf32, #tpu.memory_space<vmem>>) attributes {dimension_semantics = [#tpu.dimension_semantics<parallel>, #tpu.dimension_semantics<arbitrary>, #tpu.dimension_semantics<arbitrary>], iteration_bounds = array<i64: 1, 2, 1>, scalar_prefetch = 0 : i64, scratch_operands = 4 : i64, tpu.core_type = #tpu.core_type<tc>, window_params = [{transform_indices = @transform_0, window_bounds = array<i64: 8, 128>}, {transform_indices = @transform_1, window_bounds = array<i64: 8, 1>}, {transform_indices = @transform_2, window_bounds = array<i64: 8, 1>}]} {
    %c0 = arith.constant 0 : index
    %c0_0 = arith.constant 0 : index
    %0 = vector.load %arg3[%c0, %c0_0] : memref<8x128xf32, #tpu.memory_space<vmem>>, vector<8x128xf32>
    %c0_i32 = arith.constant 0 : i32
    %1 = arith.cmpi eq, %arg1, %c0_i32 : i32
    %c0_i32_1 = arith.constant 0 : i32
    %2 = arith.cmpi eq, %arg2, %c0_i32_1 : i32
    %3 = arith.andi %1, %2 : i1
    %4 = arith.extui %3 : i1 to i32
    %c0_i32_2 = arith.constant 0 : i32
    %5 = arith.cmpi ne, %4, %c0_i32_2 : i32
    scf.if %5 {
      %cst = arith.constant 0.000000e+00 : f32
      %22 = vector.broadcast %cst : f32 to vector<8x1xf32>
      %c0_12 = arith.constant 0 : index
      %c0_13 = arith.constant 0 : index
      %23 = vector.load %arg6[%c0_12, %c0_13] : memref<8x1xf32, #tpu.memory_space<vmem>>, vector<8x1xf32>
      tpu.vector_store %arg6[%c0_12, %c0_13], %22 {strides = array<i32>} : memref<8x1xf32, #tpu.memory_space<vmem>>, vector<8x1xf32>,
    } else {
    }
    %c0_i32_3 = arith.constant 0 : i32
    %6 = arith.cmpi eq, %arg1, %c0_i32_3 : i32
    %7 = arith.extui %6 : i1 to i32
    %c0_i32_4 = arith.constant 0 : i32
    %8 = arith.cmpi ne, %7, %c0_i32_4 : i32
    scf.if %8 {
      %c0_12 = arith.constant 0 : index
      %c0_13 = arith.constant 0 : index
      %22 = vector.load %arg6[%c0_12, %c0_13] : memref<8x1xf32, #tpu.memory_space<vmem>>, vector<8x1xf32>
      %23 = arith.mulf %0, %0 : vector<8x128xf32>
      %cst = arith.constant dense<0.000000e+00> : vector<8xf32>
      %24 = vector.multi_reduction <add>, %23, %cst [1] : vector<8x128xf32> to vector<8xf32>
      %25 = vector.shape_cast %24 : vector<8xf32> to vector<8x1xf32>
      %26 = arith.addf %22, %25 : vector<8x1xf32>
      %c0_14 = arith.constant 0 : index
      %c0_15 = arith.constant 0 : index
      %27 = vector.load %arg6[%c0_14, %c0_15] : memref<8x1xf32, #tpu.memory_space<vmem>>, vector<8x1xf32>
      tpu.vector_store %arg6[%c0_14, %c0_15], %26 {strides = array<i32>} : memref<8x1xf32, #tpu.memory_space<vmem>>, vector<8x1xf32>,
    } else {
    }
    %c1_i32 = arith.constant 1 : i32
    %9 = arith.cmpi eq, %arg1, %c1_i32 : i32
    %c0_i32_5 = arith.constant 0 : i32
    %10 = arith.cmpi eq, %arg2, %c0_i32_5 : i32
    %11 = arith.andi %9, %10 : i1
    %12 = arith.extui %11 : i1 to i32
    %c0_i32_6 = arith.constant 0 : i32
    %13 = arith.cmpi ne, %12, %c0_i32_6 : i32
    scf.if %13 {
      %cst = arith.constant 0xFF800000 : f32
      %22 = vector.broadcast %cst : f32 to vector<8x1xf32>
      %c0_12 = arith.constant 0 : index
      %c0_13 = arith.constant 0 : index
      %23 = vector.load %arg7[%c0_12, %c0_13] : memref<8x1xf32, #tpu.memory_space<vmem>>, vector<8x1xf32>
      tpu.vector_store %arg7[%c0_12, %c0_13], %22 {strides = array<i32>} : memref<8x1xf32, #tpu.memory_space<vmem>>, vector<8x1xf32>,
      %cst_14 = arith.constant 0.000000e+00 : f32
      %24 = vector.broadcast %cst_14 : f32 to vector<8x1xf32>
      %c0_15 = arith.constant 0 : index
      %c0_16 = arith.constant 0 : index
      %25 = vector.load %arg8[%c0_15, %c0_16] : memref<8x1xf32, #tpu.memory_space<vmem>>, vector<8x1xf32>
      tpu.vector_store %arg8[%c0_15, %c0_16], %24 {strides = array<i32>} : memref<8x1xf32, #tpu.memory_space<vmem>>, vector<8x1xf32>,
      %cst_17 = arith.constant 0.000000e+00 : f32
      %26 = vector.broadcast %cst_17 : f32 to vector<8x1xf32>
      %c0_18 = arith.constant 0 : index
      %c0_19 = arith.constant 0 : index
      %27 = vector.load %arg9[%c0_18, %c0_19] : memref<8x1xf32, #tpu.memory_space<vmem>>, vector<8x1xf32>
      tpu.vector_store %arg9[%c0_18, %c0_19], %26 {strides = array<i32>} : memref<8x1xf32, #tpu.memory_space<vmem>>, vector<8x1xf32>,
    } else {
    }
    %c1_i32_7 = arith.constant 1 : i32
    %14 = arith.cmpi eq, %arg1, %c1_i32_7 : i32
    %15 = arith.extui %14 : i1 to i32
    %c0_i32_8 = arith.constant 0 : i32
    %16 = arith.cmpi ne, %15, %c0_i32_8 : i32
    scf.if %16 {
      %c0_12 = arith.constant 0 : index
      %c0_13 = arith.constant 0 : index
      %22 = vector.load %arg6[%c0_12, %c0_13] : memref<8x1xf32, #tpu.memory_space<vmem>>, vector<8x1xf32>
      %cst = arith.constant 1.000000e-24 : f32
      %23 = vector.broadcast %cst : f32 to vector<8x1xf32>
      %24 = arith.maximumf %22, %23 : vector<8x1xf32>
      %25 = math.rsqrt %24 : vector<8x1xf32>
      %c0_14 = arith.constant 0 : index
      %c0_15 = arith.constant 0 : index
      %26 = vector.load %arg4[%c0_14, %c0_15] : memref<8x1xi32, #tpu.memory_space<vmem>>, vector<8x1xi32>
      %27 = tpu.iota {dimensions = array<i32: 1>} : vector<8x128xi32>
      %c128_i32 = arith.constant 128 : i32
      %28 = arith.muli %arg2, %c128_i32 : i32
      %29 = vector.broadcast %28 : i32 to vector<8x128xi32>
      %30 = arith.addi %27, %29 : vector<8x128xi32>
      %31 = vector.broadcast %26 : vector<8x1xi32> to vector<8x128xi32>
      %32 = arith.cmpi eq, %30, %31 : vector<8x128xi32>
      %c16_i32 = arith.constant 16 : i32
      %33 = vector.broadcast %c16_i32 : i32 to vector<8x128xi32>
      %34 = arith.cmpi slt, %30, %33 : vector<8x128xi32>
      %35 = vector.broadcast %25 : vector<8x1xf32> to vector<8x128xf32>
      %36 = arith.mulf %0, %35 : vector<8x128xf32>
      %cst_16 = arith.constant 5.000000e-01 : f32
      %cst_17 = arith.constant 0.000000e+00 : f32
      %37 = vector.broadcast %cst_16 : f32 to vector<8x128xf32>
      %38 = vector.broadcast %cst_17 : f32 to vector<8x128xf32>
      %39 = arith.select %32, %37, %38 : vector<8x128xi1>, vector<8x128xf32>
      %40 = arith.subf %36, %39 : vector<8x128xf32>
      %cst_18 = arith.constant 6.400000e+01 : f32
      %41 = vector.broadcast %cst_18 : f32 to vector<8x128xf32>
      %42 = arith.mulf %41, %40 : vector<8x128xf32>
      %cst_19 = arith.constant 0xFF800000 : f32
      %43 = vector.broadcast %cst_19 : f32 to vector<8x128xf32>
      %44 = arith.select %34, %42, %43 : vector<8x128xi1>, vector<8x128xf32>
      %c0_20 = arith.constant 0 : index
      %c0_21 = arith.constant 0 : index
      %45 = vector.load %arg7[%c0_20, %c0_21] : memref<8x1xf32, #tpu.memory_space<vmem>>, vector<8x1xf32>
      %cst_22 = arith.constant dense<0xFF800000> : vector<8xf32>
      %46 = vector.multi_reduction <maximumf>, %44, %cst_22 [1] : vector<8x128xf32> to vector<8xf32>
      %47 = vector.shape_cast %46 : vector<8xf32> to vector<8x1xf32>
      %48 = arith.maximumf %45, %47 : vector<8x1xf32>
      %c0_23 = arith.constant 0 : index
      %c0_24 = arith.constant 0 : index
      %49 = vector.load %arg7[%c0_23, %c0_24] : memref<8x1xf32, #tpu.memory_space<vmem>>, vector<8x1xf32>
      %50 = arith.subf %49, %48 : vector<8x1xf32>
      %51 = math.exp %50 : vector<8x1xf32>
      %c0_25 = arith.constant 0 : index
      %c0_26 = arith.constant 0 : index
      %52 = vector.load %arg8[%c0_25, %c0_26] : memref<8x1xf32, #tpu.memory_space<vmem>>, vector<8x1xf32>
      %53 = arith.mulf %51, %52 : vector<8x1xf32>
      %54 = vector.broadcast %48 : vector<8x1xf32> to vector<8x128xf32>
      %55 = arith.subf %44, %54 : vector<8x128xf32>
      %56 = math.exp %55 : vector<8x128xf32>
      %cst_27 = arith.constant dense<0.000000e+00> : vector<8xf32>
      %57 = vector.multi_reduction <add>, %56, %cst_27 [1] : vector<8x128xf32> to vector<8xf32>
      %58 = vector.shape_cast %57 : vector<8xf32> to vector<8x1xf32>
      %59 = arith.addf %53, %58 : vector<8x1xf32>
      %c0_28 = arith.constant 0 : index
      %c0_29 = arith.constant 0 : index
      %60 = vector.load %arg8[%c0_28, %c0_29] : memref<8x1xf32, #tpu.memory_space<vmem>>, vector<8x1xf32>
      tpu.vector_store %arg8[%c0_28, %c0_29], %59 {strides = array<i32>} : memref<8x1xf32, #tpu.memory_space<vmem>>, vector<8x1xf32>,
      %c0_30 = arith.constant 0 : index
      %c0_31 = arith.constant 0 : index
      %61 = vector.load %arg7[%c0_30, %c0_31] : memref<8x1xf32, #tpu.memory_space<vmem>>, vector<8x1xf32>
      tpu.vector_store %arg7[%c0_30, %c0_31], %48 {strides = array<i32>} : memref<8x1xf32, #tpu.memory_space<vmem>>, vector<8x1xf32>,
      %c0_32 = arith.constant 0 : index
      %c0_33 = arith.constant 0 : index
      %62 = vector.load %arg9[%c0_32, %c0_33] : memref<8x1xf32, #tpu.memory_space<vmem>>, vector<8x1xf32>
      %cst_34 = arith.constant 0.000000e+00 : f32
      %63 = vector.broadcast %cst_34 : f32 to vector<8x128xf32>
      %64 = arith.select %32, %44, %63 : vector<8x128xi1>, vector<8x128xf32>
      %cst_35 = arith.constant dense<0.000000e+00> : vector<8xf32>
      %65 = vector.multi_reduction <add>, %64, %cst_35 [1] : vector<8x128xf32> to vector<8xf32>
      %66 = vector.shape_cast %65 : vector<8xf32> to vector<8x1xf32>
      %67 = arith.addf %62, %66 : vector<8x1xf32>
      %c0_36 = arith.constant 0 : index
      %c0_37 = arith.constant 0 : index
      %68 = vector.load %arg9[%c0_36, %c0_37] : memref<8x1xf32, #tpu.memory_space<vmem>>, vector<8x1xf32>
      tpu.vector_store %arg9[%c0_36, %c0_37], %67 {strides = array<i32>} : memref<8x1xf32, #tpu.memory_space<vmem>>, vector<8x1xf32>,
    } else {
    }
    %c1_i32_9 = arith.constant 1 : i32
    %17 = arith.cmpi eq, %arg1, %c1_i32_9 : i32
    %c0_i32_10 = arith.constant 0 : i32
    %18 = arith.cmpi eq, %arg2, %c0_i32_10 : i32
    %19 = arith.andi %17, %18 : i1
    %20 = arith.extui %19 : i1 to i32
    %c0_i32_11 = arith.constant 0 : i32
    %21 = arith.cmpi ne, %20, %c0_i32_11 : i32
    scf.if %21 {
      %c0_12 = arith.constant 0 : index
      %c0_13 = arith.constant 0 : index
      %22 = vector.load %arg7[%c0_12, %c0_13] : memref<8x1xf32, #tpu.memory_space<vmem>>, vector<8x1xf32>
      %c0_14 = arith.constant 0 : index
      %c0_15 = arith.constant 0 : index
      %23 = vector.load %arg8[%c0_14, %c0_15] : memref<8x1xf32, #tpu.memory_space<vmem>>, vector<8x1xf32>
      %24 = math.log %23 : vector<8x1xf32>
      %25 = arith.addf %22, %24 : vector<8x1xf32>
      %c0_16 = arith.constant 0 : index
      %c0_17 = arith.constant 0 : index
      %26 = vector.load %arg9[%c0_16, %c0_17] : memref<8x1xf32, #tpu.memory_space<vmem>>, vector<8x1xf32>
      %27 = arith.subf %25, %26 : vector<8x1xf32>
      %c0_18 = arith.constant 0 : index
      %c0_19 = arith.constant 0 : index
      %28 = vector.load %arg5[%c0_18, %c0_19] : memref<8x1xf32, #tpu.memory_space<vmem>>, vector<8x1xf32>
      tpu.vector_store %arg5[%c0_18, %c0_19], %27 {strides = array<i32>} : memref<8x1xf32, #tpu.memory_space<vmem>>, vector<8x1xf32>,
    } else {
    }
    return
  }
  func.func @transform_0(%arg0: i32, %arg1: i32, %arg2: i32) -> (i32, i32) {
    %c0_i32 = arith.constant 0 : i32
    return %arg0, %arg2 : i32, i32
  }
  func.func @transform_1(%arg0: i32, %arg1: i32, %arg2: i32) -> (i32, i32) {
    %c0_i32 = arith.constant 0 : i32
    %c0_i32_0 = arith.constant 0 : i32
    return %arg0, %c0_i32 : i32, i32
  }
  func.func @transform_2(%arg0: i32, %arg1: i32, %arg2: i32) -> (i32, i32) {
    %c0_i32 = arith.constant 0 : i32
    %c0_i32_0 = arith.constant 0 : i32
    return %arg0, %c0_i32 : i32, i32
  }
}

</mosaic_0001>

<llo_original>
// kernel: tpu_custom_call.1
$region0: #{tpu_custom_call.1}
  #allocation0 [shape = 'u32[]', space=smem, size = 0x4, offset = 0x4, fixed_abs, tag = 'smem constant byte address 0x4 - core index']
  #allocation1 [shape = 'u32[144,128]{1,0:T(1,128)}', space=vmem, size = 0x12000, scoped, tag = 'internal scratch']
  #allocation2 [shape = 'f32[8,1]{1,0:T(8,128)}', space=vmem, size = 0x1000, scoped, tag = 'scratch operand']
  #allocation3 [shape = 'f32[8,1]{1,0:T(8,128)}', space=vmem, size = 0x1000, scoped, tag = 'scratch operand']
  #allocation4 [shape = 'f32[8,1]{1,0:T(8,128)}', space=vmem, size = 0x1000, scoped, tag = 'scratch operand']
  #allocation5 [shape = 'f32[8,1]{1,0:T(8,128)}', space=vmem, size = 0x1000, scoped, tag = 'scratch operand']
  %s0 = inlined_call_operand.vmem [shape: f32[8,128], index: 0, kind: input, shape index: {}]
  %s1 = inlined_call_operand.vmem [shape: s32[8,1], index: 1, kind: input, shape index: {}]
  %s2 = inlined_call_operand.vmem [shape: f32[8,1], index: 2, kind: output, shape index: {}]
  %s3 = sld [smem:[#allocation0]]
  $region61: #{tpu_custom_call.1} parent=0
    _
  %s5 = ssub.s32 1, %s3
  %s6 = scalar_select 0, %s5, %s3
  loop: start=0, step=1, limit=4
  $region2: #{tpu_custom_call.1} parent=0 // loop_pre_header
    _
  $region3: #{tpu_custom_call.1} parent=0 // loop_header
    %s8 = sphi 0, %s12
    %p9 = scmp.ge.s32.totalorder %s8, 4
    %s15 = sphi 0, %s34
    %s16 = sphi 0, %s30
    %s17 = sphi 0, %s26
    %s18 = sphi 0, %s15
    %s19 = sphi 0, %s16
    %s20 = sphi 0, %s17
    %s21 = sphi 0, %s18
    %s22 = sphi 0, %s19
    %s23 = sphi 0, %s20
    %s39 = sphi 0, %s41
    %s42 = sphi 0, %s39
    %s43 = sphi 0, %s42
    %s59 = sphi 0, %s43
    %s65 = sphi 0, %s67
    %s68 = sphi 0, %s65
    %s69 = sphi 0, %s68
    %s85 = sphi 0, %s69
    %s91 = sphi 0, %s93
    %s94 = sphi 0, %s91
    %s95 = sphi 0, %s94
    %s111 = sphi 0, %s95
  $region4: #{tpu_custom_call.1} parent=0 // loop_header_branch
    %11 = sbr.rel (%p9) target = $region8
  $region5: #{tpu_custom_call.1} parent=0 // loop_body
    %s13 = ssub.s32 %s8, 1
    %s14 = ssub.s32 %s8, 2
    %s24 = sadd.s32 1, %s17
    %p25 = scmp.ge.s32.totalorder %s24, 1
    %s26 = scalar_select %p25, 0, %s24
    %s27 = sadd.s32 1, %s16
    %s28 = scalar_select %p25, %s27, %s16
    %p29 = scmp.ge.s32.totalorder %s28, 2
    %s30 = scalar_select %p29, 0, %s28
    %s31 = sadd.s32 1, %s15
    %s32 = scalar_select %p29, %s31, %s15
    %p33 = scmp.ge.s32.totalorder %s32, 1
    %s34 = scalar_select %p33, 0, %s32
    %s35 = ssub.s32 %s15, %s34
    %s36 = ssub.s32 %s17, %s26
    %s37 = sor.u32 %s35, %s36
    %p38 = scmp.eq.s32.totalorder %s37, 0
    %s40 = sadd.s32 %s39, 1
    %s41 = scalar_select %p38, %s39, %s40
    %p44 = pneg %p38
    %p45 = scmp.eq.s32.totalorder %s8, 1
    %p46 = por %p44, %p45
    %p47 = scmp.ne.s32.totalorder %s39, %s42
    %p48 = scmp.eq.s32.totalorder %s8, 0
    %p49 = por %p47, %p48
    %p50 = scmp.ne.s32.totalorder %s39, %s42
    %p51 = scmp.eq.s32.totalorder %s13, 1
    %p52 = por %p50, %p51
    %p53 = scmp.ne.s32.totalorder %s42, %s43
    %p54 = scmp.eq.s32.totalorder %s13, 0
    %p55 = por %p53, %p54
    %p56 = scmp.ne.s32.totalorder %s42, %s43
    %p57 = scmp.eq.s32.totalorder %s14, 1
    %p58 = por %p56, %p57
    %p60 = scmp.ne.s32.totalorder %s43, %s59
    %p61 = scmp.eq.s32.totalorder %s14, 0
    %p62 = por %p60, %p61
    %s63 = ssub.s32 %s15, %s34
    %p64 = scmp.eq.s32.totalorder %s63, 0
    %s66 = sadd.s32 %s65, 1
    %s67 = scalar_select %p64, %s65, %s66
    %p70 = pneg %p64
    %p71 = scmp.eq.s32.totalorder %s8, 1
    %p72 = por %p70, %p71
    %p73 = scmp.ne.s32.totalorder %s65, %s68
    %p74 = scmp.eq.s32.totalorder %s8, 0
    %p75 = por %p73, %p74
    %p76 = scmp.ne.s32.totalorder %s65, %s68
    %p77 = scmp.eq.s32.totalorder %s13, 1
    %p78 = por %p76, %p77
    %p79 = scmp.ne.s32.totalorder %s68, %s69
    %p80 = scmp.eq.s32.totalorder %s13, 0
    %p81 = por %p79, %p80
    %p82 = scmp.ne.s32.totalorder %s68, %s69
    %p83 = scmp.eq.s32.totalorder %s14, 1
    %p84 = por %p82, %p83
    %p86 = scmp.ne.s32.totalorder %s69, %s85
    %p87 = scmp.eq.s32.totalorder %s14, 0
    %p88 = por %p86, %p87
    %s89 = ssub.s32 %s15, %s34
    %p90 = scmp.eq.s32.totalorder %s89, 0
    %s92 = sadd.s32 %s91, 1
    %s93 = scalar_select %p90, %s91, %s92
    %p96 = pneg %p90
    %p97 = scmp.eq.s32.totalorder %s8, 1
    %p98 = por %p96, %p97
    %p99 = scmp.ne.s32.totalorder %s91, %s94
    %p100 = scmp.eq.s32.totalorder %s8, 0
    %p101 = por %p99, %p100
    %p102 = scmp.ne.s32.totalorder %s91, %s94
    %p103 = scmp.eq.s32.totalorder %s13, 1
    %p104 = por %p102, %p103
    %p105 = scmp.ne.s32.totalorder %s94, %s95
    %p106 = scmp.eq.s32.totalorder %s13, 0
    %p107 = por %p105, %p106
    %p108 = scmp.ne.s32.totalorder %s94, %s95
    %p109 = scmp.eq.s32.totalorder %s14, 1
    %p110 = por %p108, %p109
    %p112 = scmp.ne.s32.totalorder %s95, %s111
    %p113 = scmp.eq.s32.totalorder %s14, 0
    %p114 = por %p112, %p113
    %p115 = scmp.le.s32.totalorder 1, %s8
    %p116 = scmp.lt.s32.totalorder %s8, 3
    %p117 = pnand %p115, %p116
    %p118 = pneg %p117
    // Predicated region
    $region9: #{tpu_custom_call.1} parent=5 // pred_check
      _
    $region10: #{tpu_custom_call.1} parent=5 // pred_check_branch
      %120 = sbr.rel (%p117) target = $region12
    $region11: #{tpu_custom_call.1} parent=5 // pred_region
      %s121 = ssub.s32 %s8, 1
      // Predicated region
      $region13: #{tpu_custom_call.1} parent=11 // pred_check
        %p122 = pneg %p55
      $region14: #{tpu_custom_call.1} parent=11 // pred_check_branch
        %124 = sbr.rel (%p122) target = $region16
      $region15: #{tpu_custom_call.1} parent=11 // pred_region
        %p125 = scmp.lt.s32.totalorder %s18, 0
        %s126 = scalar_select %p125, %s18, 0
        %p127 = scmp.lt.s32.totalorder %s20, 0
        %s128 = scalar_select %p127, %s20, 0
        %s129 = sadd.s32 %s128, %s126
        %s130 = smul.addr %s129, 8
        %s131 = scalar_lea.vmem %s0, %s130
      $region16: #{tpu_custom_call.1} parent=11 // pred_fallthru
        _
      // Predicated region
      $region17: #{tpu_custom_call.1} parent=11 // pred_check
        %p132 = pneg %p81
      $region18: #{tpu_custom_call.1} parent=11 // pred_check_branch
        %134 = sbr.rel (%p132) target = $region20
      $region19: #{tpu_custom_call.1} parent=11 // pred_region
        %p135 = scmp.lt.s32.totalorder %s18, 0
        %s136 = scalar_select %p135, %s18, 0
        %s137 = smul.addr %s136, 8
        %s138 = scalar_lea.vmem %s1, %s137
      $region20: #{tpu_custom_call.1} parent=11 // pred_fallthru
        _
    $region12: #{tpu_custom_call.1} parent=5 // pred_fallthru
      _
    %p139 = scmp.lt.s32.totalorder %s8, 2
    // Predicated region
    $region21: #{tpu_custom_call.1} parent=5 // pred_check
      %p140 = pneg %p139
    $region22: #{tpu_custom_call.1} parent=5 // pred_check_branch
      %142 = sbr.rel (%p140) target = $region24
    $region23: #{tpu_custom_call.1} parent=5 // pred_region
      _
    $region24: #{tpu_custom_call.1} parent=5 // pred_fallthru
      _
    %p143 = scmp.le.s32.totalorder 1, %s8
    %p144 = scmp.lt.s32.totalorder %s8, 3
    %p145 = pnand %p143, %p144
    %p146 = pneg %p145
    // Predicated region
    $region25: #{tpu_custom_call.1} parent=5 // pred_check
      _
    $region26: #{tpu_custom_call.1} parent=5 // pred_check_branch
      %148 = sbr.rel (%p145) target = $region28
    $region27: #{tpu_custom_call.1} parent=5 // pred_region
      %s149 = ssub.s32 %s8, 1
      %p150 = scmp.lt.s32.totalorder %s18, 0
      %s151 = scalar_select %p150, %s18, 0
      %p152 = scmp.lt.s32.totalorder %s20, 0
      %s153 = scalar_select %p152, %s20, 0
      %s154 = sadd.s32 %s153, %s151
      %s155 = smul.addr %s154, 8
      %s156 = scalar_lea.vmem %s0, %s155
      %p157 = pneg %p55
      %p158 = pneg %p52
      %p159 = scmp.lt.s32.totalorder %s18, 0
      %s160 = scalar_select %p159, %s18, 0
      %s161 = smul.addr %s160, 8
      %s162 = scalar_lea.vmem %s1, %s161
      %p163 = pneg %p81
      %p164 = pneg %p78
      %p165 = pneg %p107
      %p166 = pneg %p104
      %p167 = scmp.lt.s32.totalorder %s18, 0
      %s168 = scalar_select %p167, %s18, 0
      %s169 = smul.addr %s168, 8
      %s170 = scalar_lea.vmem %s2, %s169
      %p171 = scmp.lt.s32.totalorder %s18, 0
      %s172 = scalar_select %p171, %s18, 0
      %p173 = scmp.lt.s32.totalorder %s20, 0
      %s174 = scalar_select %p173, %s20, 0
      %s175 = sadd.s32 %s174, %s172
      %s176 = smul.addr %s175, 8
      %s177 = scalar_lea.vmem %s0, %s176
      %p178 = scmp.lt.s32.totalorder %s18, 0
      %s179 = scalar_select %p178, %s18, 0
      %s180 = smul.addr %s179, 8
      %s181 = scalar_lea.vmem %s1, %s180
      %p182 = scmp.lt.s32.totalorder %s18, 0
      %s183 = scalar_select %p182, %s18, 0
      %s184 = smul.addr %s183, 8
      %s185 = scalar_lea.vmem %s2, %s184
      %v186 = vld [vmem:[%s177] sm:$0xff]
      %p187 = scmp.eq.s32.totalorder %s19, 0
      %p188 = scmp.eq.s32.totalorder %s20, 0
      %p189 = pnand %p187, %p188
      %p190 = pneg %p189
      // Predicated region
      $region29: #{tpu_custom_call.1} parent=27 // pred_check
        _
      $region30: #{tpu_custom_call.1} parent=27 // pred_check_branch
        %192 = sbr.rel (%p189) target = $region32
      $region31: #{tpu_custom_call.1} parent=27 // pred_region
        %vm193 = vcmask 7168
        %194 = vst.msk [vmem:[#allocation2] sm:$0xff] %vm193, 0.0
      $region32: #{tpu_custom_call.1} parent=27 // pred_fallthru
        _
      // Predicated region
      $region33: #{tpu_custom_call.1} parent=27 // pred_check
        %p195 = pneg %p187
      $region34: #{tpu_custom_call.1} parent=27 // pred_check_branch
        %197 = sbr.rel (%p195) target = $region36
      $region35: #{tpu_custom_call.1} parent=27 // pred_region
        %v198 = vld [vmem:[#allocation2] sm:$0xff]
        %v199 = vmul.f32 %v186, %v186
        %200 = vadd.xlane.f32.xlu0 %v199
        %v201 = vpop.xlane.xlu0 %200
        %v202 = vadd.f32 %v198, %v201
        %vm203 = vcmask 7168
        %204 = vst.msk [vmem:[#allocation2] sm:$0xff] %vm203, %v202
      $region36: #{tpu_custom_call.1} parent=27 // pred_fallthru
        _
      %p205 = scmp.eq.s32.totalorder %s19, 1
      %p206 = pnand %p205, %p188
      %p207 = pneg %p206
      // Predicated region
      $region37: #{tpu_custom_call.1} parent=27 // pred_check
        _
      $region38: #{tpu_custom_call.1} parent=27 // pred_check_branch
        %209 = sbr.rel (%p206) target = $region40
      $region39: #{tpu_custom_call.1} parent=27 // pred_region
        %vm210 = vcmask 7168
        %211 = vst.msk [vmem:[#allocation3] sm:$0xff] %vm210, -inf
        %212 = vst.msk [vmem:[#allocation4] sm:$0xff] %vm210, 0.0
        %213 = vst.msk [vmem:[#allocation5] sm:$0xff] %vm210, 0.0
      $region40: #{tpu_custom_call.1} parent=27 // pred_fallthru
        _
      // Predicated region
      $region41: #{tpu_custom_call.1} parent=27 // pred_check
        %p214 = pneg %p205
      $region42: #{tpu_custom_call.1} parent=27 // pred_check_branch
        %216 = sbr.rel (%p214) target = $region44
      $region43: #{tpu_custom_call.1} parent=27 // pred_region
        %v217 = vld [vmem:[#allocation2] sm:$0xff]
        %v218 = vmax.f32 %v217, 1e-24
        %v219 = vrsqrt.pop %v218
        %v220 = vld [vmem:[%s181] sm:$0xff]
        %v221 = vlaneseq
        %v222 = vand.u32 %v221, 127
        %s223 = smul.u32 %s20, 128
        %v224 = vstv %s223
        %v225 = vadd.s32 %v222, %v224
        %226 = vset.pattern.permute.xlu0 0
        %227 = vperm.xlu0 %226, %v220
        %v228 = vpop.permute.xlu0 %227
        %vm229 = vcmp.eq.s32.totalorder %v225, %v228
        %vm230 = vcmp.lt.s32.totalorder %v225, 16
        %232 = vset.pattern.permute.xlu0 0
        %233 = vperm.xlu0 %232, %v219
        %v234 = vpop.permute.xlu0 %233
        %v236 = vmul.f32 %v186, %v234
        %v237 = vsel %vm229, 0.5, 0.0
        %v238 = vsub.f32 %v236, %v237
        %v239 = vmul.f32 %v238, 64.0
        %v240 = vsel %vm230, %v239, -inf
        %v241 = vld [vmem:[#allocation3] sm:$0xff]
        %242 = vmax.xlane.f32.xlu0 %v240
        %v243 = vpop.xlane.xlu0 %242
        %v244 = vmax.f32 %v241, %v243
        %v245 = vsub.f32 %v241, %v244
        %v246 = vmul.f32 %v245, 1.442695
        %v247 = vpow.pop %v246
        %v248 = vld [vmem:[#allocation4] sm:$0xff]
        %v249 = vmul.f32 %v247, %v248
        %251 = vset.pattern.permute.xlu0 0
        %252 = vperm.xlu0 %251, %v244
        %v253 = vpop.permute.xlu0 %252
        %v255 = vsub.f32 %v240, %v253
        %v256 = vmul.f32 %v255, 1.442695
        %v257 = vpow.pop %v256
        %258 = vadd.xlane.f32.xlu0 %v257
        %v259 = vpop.xlane.xlu0 %258
        %v260 = vadd.f32 %v249, %v259
        %vm261 = vcmask 7168
        %262 = vst.msk [vmem:[#allocation4] sm:$0xff] %vm261, %v260
        %263 = vst.msk [vmem:[#allocation3] sm:$0xff] %vm261, %v244
        %v264 = vld [vmem:[#allocation5] sm:$0xff]
        %v265 = vsel %vm229, %v240, 0.0
        %266 = vadd.xlane.f32.xlu0 %v265
        %v267 = vpop.xlane.xlu0 %266
        %v268 = vadd.f32 %v264, %v267
        %269 = vst.msk [vmem:[#allocation5] sm:$0xff] %vm261, %v268
      $region44: #{tpu_custom_call.1} parent=27 // pred_fallthru
        _
      // Predicated region
      $region45: #{tpu_custom_call.1} parent=27 // pred_check
        _
      $region46: #{tpu_custom_call.1} parent=27 // pred_check_branch
        %271 = sbr.rel (%p206) target = $region48
      $region47: #{tpu_custom_call.1} parent=27 // pred_region
        %v272 = vld [vmem:[#allocation3] sm:$0xff]
        %v273 = vld [vmem:[#allocation4] sm:$0xff]
        %v274 = vlog2.pop %v273
        %v275 = vmul.f32 %v274, 0.6931472
        %v276 = vadd.f32 %v272, %v275
        %v277 = vld [vmem:[#allocation5] sm:$0xff]
        %v278 = vsub.f32 %v276, %v277
        %vm279 = vcmask 7168
        %280 = vst.msk [vmem:[%s185] sm:$0xff] %vm279, %v278
      $region48: #{tpu_custom_call.1} parent=27 // pred_fallthru
        _
      %p281 = scmp.lt.s32.totalorder %s18, 0
      %s282 = scalar_select %p281, %s18, 0
      %s283 = smul.addr %s282, 8
      %s284 = scalar_lea.vmem %s2, %s283
      // Predicated region
      $region49: #{tpu_custom_call.1} parent=27 // pred_check
        %p285 = pneg %p104
      $region50: #{tpu_custom_call.1} parent=27 // pred_check_branch
        %287 = sbr.rel (%p285) target = $region52
      $region51: #{tpu_custom_call.1} parent=27 // pred_region
        _
      $region52: #{tpu_custom_call.1} parent=27 // pred_fallthru
        _
      // Predicated region
      $region53: #{tpu_custom_call.1} parent=27 // pred_check
        %p288 = pneg %p104
      $region54: #{tpu_custom_call.1} parent=27 // pred_check_branch
        %290 = sbr.rel (%p288) target = $region56
      $region55: #{tpu_custom_call.1} parent=27 // pred_region
        %p291 = scmp.lt.s32.totalorder %s18, 0
        %s292 = scalar_select %p291, %s18, 0
        %s293 = smul.addr %s292, 8
        %s294 = scalar_lea.vmem %s2, %s293
      $region56: #{tpu_custom_call.1} parent=27 // pred_fallthru
        _
    $region28: #{tpu_custom_call.1} parent=5 // pred_fallthru
      _
    %p295 = scmp.le.s32.totalorder 2, %s8
    // Predicated region
    $region57: #{tpu_custom_call.1} parent=5 // pred_check
      %p296 = pneg %p295
    $region58: #{tpu_custom_call.1} parent=5 // pred_check_branch
      %298 = sbr.rel (%p296) target = $region60
    $region59: #{tpu_custom_call.1} parent=5 // pred_region
      %s299 = ssub.s32 %s8, 2
    $region60: #{tpu_custom_call.1} parent=5 // pred_fallthru
      _
  $region6: #{tpu_custom_call.1} parent=0 // loop_footer
    %s12 = sadd.s32 1, %s8
  $region7: #{tpu_custom_call.1} parent=0 // loop_footer_branch
    %7 = sbr.rel target = $region3
  $region8: #{tpu_custom_call.1} parent=0 // loop_exit
    _

</llo_original>
